<compile_context>
chip_gen: v5e
topology: v5e:2x2
jax: 0.10.0
libtpu: 0.0.40
codegen_flags: <defaults>
</compile_context>

<pallas_src>
import functools

import jax
import jax.numpy as jnp
from jax.experimental import pallas as pl
from jax.experimental.pallas import tpu as pltpu


def _gelu_tanh(x):
    c = 0.7978845608028654  # sqrt(2/pi)
    return 0.5 * x * (1.0 + jnp.tanh(c * (x + 0.044715 * x * x * x)))


# --------------------------------------------------------------------------- #
# Fused linear:  [optional LayerNorm] -> x @ w + b -> [optional GELU] -> [+res]
# --------------------------------------------------------------------------- #
def _make_linear_kernel(*, ln_eps=None, activation=None, has_residual=False,
                        cache_ln=False):
    def kernel(*refs):
        refs = list(refs)
        x_ref = refs.pop(0)
        if ln_eps is not None:
            g_ref = refs.pop(0)
            beta_ref = refs.pop(0)
        w_ref = refs.pop(0)
        b_ref = refs.pop(0)
        r_ref = refs.pop(0) if has_residual else None
        o_ref = refs.pop(0)
        xn_ref = refs.pop(0) if cache_ln else None  # VMEM scratch for cached LN(x)

        if ln_eps is not None:
            def compute_ln():
                # LN statistics in f32, result cast back to the native MXU dtype.
                xf = x_ref[...].astype(jnp.float32)
                mu = jnp.mean(xf, axis=-1, keepdims=True)
                var = jnp.mean(jnp.square(xf - mu), axis=-1, keepdims=True)
                xn = (xf - mu) * jax.lax.rsqrt(var + ln_eps)
                xn = (xn * g_ref[...].astype(jnp.float32)
                      + beta_ref[...].astype(jnp.float32))
                return xn.astype(x_ref.dtype)

            if cache_ln:
                # Compute LN(x_tile) once per i tile (j == 0), reuse for all j > 0.
                @pl.when(pl.program_id(1) == 0)
                def _():
                    xn_ref[...] = compute_ln()
                x_in = xn_ref[...]
            else:
                x_in = compute_ln()
        else:
            x_in = x_ref[...]

        # Native-dtype operands on the MXU, f32 accumulation.
        acc = jnp.dot(x_in, w_ref[...], preferred_element_type=jnp.float32)
        acc = acc + b_ref[...].astype(jnp.float32)
        if activation == "gelu":
            # Kept in f32 (v5e EUP has no bf16); on v6e/v7x a bf16 GELU would be
            # a further EUP-throughput win when the model runs in bf16.
            acc = _gelu_tanh(acc)
        if has_residual:
            acc = acc + r_ref[...].astype(jnp.float32)
        o_ref[...] = acc.astype(o_ref.dtype)

    return kernel


def fused_linear(x, w, b, *, gamma=None, beta=None, ln_eps=None,
                 activation=None, residual=None, tm=512, tn=256):
    """y = act(LN(x) @ w + b) (+ residual); x:[M,K], w:[K,N], b:[N]."""
    M, K = x.shape
    Kw, N = w.shape
    assert K == Kw, (K, Kw)

    # Full-dim blocks for small dims, MXU/lane-aligned tiles otherwise.
    tm = M if M <= tm else tm
    tn = N if N <= tn else tn
    grid_m = pl.cdiv(M, tm)
    grid_n = pl.cdiv(N, tn)

    cache_ln = (ln_eps is not None) and (grid_n > 1)

    inputs = [x]
    in_specs = [pl.BlockSpec((tm, K), lambda i, j: (i, 0))]
    if ln_eps is not None:
        inputs += [gamma.reshape(1, K), beta.reshape(1, K)]
        in_specs += [pl.BlockSpec((1, K), lambda i, j: (0, 0)),
                     pl.BlockSpec((1, K), lambda i, j: (0, 0))]
    inputs += [w, b.reshape(1, N)]
    in_specs += [pl.BlockSpec((K, tn), lambda i, j: (0, j)),
                 pl.BlockSpec((1, tn), lambda i, j: (0, j))]
    if residual is not None:
        inputs.append(residual)
        in_specs.append(pl.BlockSpec((tm, tn), lambda i, j: (i, j)))

    scratch_shapes = []
    if cache_ln:
        scratch_shapes.append(pltpu.VMEM((tm, K), x.dtype))

    itemsize = jnp.dtype(x.dtype).itemsize
    # x streamed once (resident across j), weights re-streamed once per i tile,
    # output written once, residual read once.
    bytes_accessed = (M * K + grid_m * K * N + M * N
                      + (M * N if residual is not None else 0)) * itemsize
    ln_rows = 0 if ln_eps is None else (M if cache_ln or grid_n == 1 else M * grid_n)

    kernel = _make_linear_kernel(ln_eps=ln_eps, activation=activation,
                                 has_residual=residual is not None,
                                 cache_ln=cache_ln)
    return pl.pallas_call(
        kernel,
        out_shape=jax.ShapeDtypeStruct((M, N), x.dtype),
        grid=(grid_m, grid_n),
        in_specs=in_specs,
        out_specs=pl.BlockSpec((tm, tn), lambda i, j: (i, j)),
        scratch_shapes=scratch_shapes,
        compiler_params=pltpu.CompilerParams(
            dimension_semantics=("parallel",
                                 "arbitrary" if cache_ln else "parallel")),
        cost_estimate=pl.CostEstimate(
            flops=2 * M * K * N,
            transcendentals=(M * N if activation == "gelu" else 0) + ln_rows,
            bytes_accessed=bytes_accessed),
    )(*inputs)


# --------------------------------------------------------------------------- #
# Attention core: softmax(q k^T * scale) @ v, all heads of one batch per step.
# --------------------------------------------------------------------------- #
def _attn_kernel(q_ref, k_ref, v_ref, o_ref, *, scale):
    # q/k/v refs: [N, H, d] slices of the [B, N, 3, H, d] qkv tensor (native dtype).
    H = q_ref.shape[1]
    q = q_ref[...]
    k = k_ref[...]
    v = v_ref[...]
    for h in range(H):  # static unroll over heads; plain 2-D MXU matmuls per head
        qh = q[:, h, :] * scale          # fold scale into q (N*d mults, not N*N)
        kh = k[:, h, :]
        vh = v[:, h, :]
        # s = q @ k^T, contracting head_dim without materializing a transpose.
        s = jax.lax.dot_general(qh, kh, (((1,), (1,)), ((), ())),
                                preferred_element_type=jnp.float32)   # [N, N] f32
        s = s - jnp.max(s, axis=-1, keepdims=True)
        p = jnp.exp(s)
        l = jnp.sum(p, axis=-1, keepdims=True)                        # [N, 1]
        o = jnp.dot(p.astype(vh.dtype), vh,
                    preferred_element_type=jnp.float32)               # [N, d] f32
        # Normalize the [N, d] output (EUP reciprocal) instead of the [N, N] probs.
        o = o * pl.reciprocal(l, approx=True)
        o_ref[:, h, :] = o.astype(o_ref.dtype)


def attention_core(qkv, scale):
    """qkv: [B, N, 3, H, d]  ->  attention output laid out [B, N, H, d]."""
    B, N, three, H, d = qkv.shape
    assert three == 3

    def comp_spec(comp):
        # Block several heads per step; last two block dims (H, d) == full dims.
        return pl.BlockSpec((None, N, None, H, d),
                            lambda b, c=comp: (b, 0, c, 0, 0))

    itemsize = jnp.dtype(qkv.dtype).itemsize
    return pl.pallas_call(
        functools.partial(_attn_kernel, scale=scale),
        out_shape=jax.ShapeDtypeStruct((B, N, H, d), qkv.dtype),
        grid=(B,),
        in_specs=[comp_spec(0), comp_spec(1), comp_spec(2)],
        out_specs=pl.BlockSpec((None, N, H, d), lambda b: (b, 0, 0, 0)),
        compiler_params=pltpu.CompilerParams(dimension_semantics=("parallel",)),
        cost_estimate=pl.CostEstimate(
            flops=4 * B * H * N * N * d,
            transcendentals=B * H * N * (N + 1),
            bytes_accessed=4 * B * N * H * d * itemsize),
    )(qkv, qkv, qkv)


# --------------------------------------------------------------------------- #
# Block forward
# --------------------------------------------------------------------------- #
def block_forward(x, params, *, num_heads, eps=1e-5):
    """Forward pass of the ViT `Block` module.  x: [B, N, C] -> [B, N, C]."""
    B, N, C = x.shape
    H = num_heads
    d = C // H
    scale = d ** -0.5
    M = B * N
    x2 = x.reshape(M, C)

    # PyTorch nn.Linear stores weight as [out, in]; the kernel consumes [in, out].
    w_qkv = params["w_qkv"].T
    w_proj = params["w_proj"].T
    w_fc1 = params["w_fc1"].T
    w_fc2 = params["w_fc2"].T

    # ---- attention branch: x + proj(attn(LN1(x))) ----
    qkv = fused_linear(x2, w_qkv, params["b_qkv"],
                       gamma=params["g1"], beta=params["beta1"], ln_eps=eps)  # [M, 3C]
    qkv = qkv.reshape(B, N, 3, H, d)          # free reshape (no transpose)
    attn = attention_core(qkv, scale)         # [B, N, H, d] already in output layout
    attn = attn.reshape(M, C)                 # free reshape
    x2 = fused_linear(attn, w_proj, params["b_proj"], residual=x2)            # [M, C]

    # ---- MLP branch: x + fc2(gelu(fc1(LN2(x)))) ----
    h = fused_linear(x2, w_fc1, params["b_fc1"],
                     gamma=params["g2"], beta=params["beta2"], ln_eps=eps,
                     activation="gelu")                                       # [M, hidden]
    out = fused_linear(h, w_fc2, params["b_fc2"], residual=x2)                # [M, C]
    return out.reshape(B, N, C)


def reference_block(x, p, *, num_heads, eps=1e-5):
    """Pure-JAX reference mirroring the PyTorch Block forward."""
    B, N, C = x.shape
    H = num_heads
    d = C // H
    scale = d ** -0.5

    def ln(z, g, b):
        mu = jnp.mean(z, axis=-1, keepdims=True)
        var = jnp.mean((z - mu) ** 2, axis=-1, keepdims=True)
        return (z - mu) / jnp.sqrt(var + eps) * g + b

    h = ln(x, p["g1"], p["beta1"])
    qkv = h @ p["w_qkv"].T + p["b_qkv"]
    qkv = qkv.reshape(B, N, 3, H, d).transpose(2, 0, 3, 1, 4)
    q, k, v = qkv[0], qkv[1], qkv[2]
    attn = (q @ jnp.swapaxes(k, -2, -1)) * scale
    attn = jax.nn.softmax(attn, axis=-1)
    y = (attn @ v).transpose(0, 2, 1, 3).reshape(B, N, C)
    x = x + (y @ p["w_proj"].T + p["b_proj"])
    h2 = ln(x, p["g2"], p["beta2"])
    h2 = _gelu_tanh(h2 @ p["w_fc1"].T + p["b_fc1"])
    x = x + (h2 @ p["w_fc2"].T + p["b_fc2"])
    return x


if __name__ == "__main__":
    # Small shapes consistent with the module: Block(dim=32, num_heads=4,
    # mlp_ratio=4.0, qkv_bias=True); x: [batch=2, seq=8, dim=32].
    B, N, C = 2, 8, 32
    num_heads = 4
    hidden = int(C * 4.0)

    key = jax.random.PRNGKey(0)
    ks = jax.random.split(key, 13)
    x = jax.random.normal(ks[0], (B, N, C), dtype=jnp.float32)
    params = {
        "g1": 1.0 + 0.1 * jax.random.normal(ks[1], (C,), dtype=jnp.float32),
        "beta1": 0.1 * jax.random.normal(ks[2], (C,), dtype=jnp.float32),
        "w_qkv": 0.02 * jax.random.normal(ks[3], (3 * C, C), dtype=jnp.float32),
        "b_qkv": 0.1 * jax.random.normal(ks[4], (3 * C,), dtype=jnp.float32),
        "w_proj": 0.02 * jax.random.normal(ks[5], (C, C), dtype=jnp.float32),
        "b_proj": 0.1 * jax.random.normal(ks[6], (C,), dtype=jnp.float32),
        "g2": 1.0 + 0.1 * jax.random.normal(ks[7], (C,), dtype=jnp.float32),
        "beta2": 0.1 * jax.random.normal(ks[8], (C,), dtype=jnp.float32),
        "w_fc1": 0.02 * jax.random.normal(ks[9], (hidden, C), dtype=jnp.float32),
        "b_fc1": 0.1 * jax.random.normal(ks[10], (hidden,), dtype=jnp.float32),
        "w_fc2": 0.02 * jax.random.normal(ks[11], (C, hidden), dtype=jnp.float32),
        "b_fc2": 0.1 * jax.random.normal(ks[12], (C,), dtype=jnp.float32),
    }

    y = block_forward(x, params, num_heads=num_heads)
    jax.block_until_ready(y)

    ref = reference_block(x, params, num_heads=num_heads)
    assert y.shape == (B, N, C)
    max_err = float(jnp.max(jnp.abs(y - ref)))
    assert jnp.allclose(y, ref, atol=2e-2, rtol=2e-2), f"max_err={max_err}"

    print("KERNEL_OK")
</pallas_src>

<mosaic_0001>
module attributes {stable_mosaic.version = 11 : i64} {
  func.func @kernel(%arg0: i32, %arg1: i32, %arg2: memref<16x32xf32, #tpu.memory_space<vmem>>, %arg3: memref<1x32xf32, #tpu.memory_space<vmem>>, %arg4: memref<1x32xf32, #tpu.memory_space<vmem>>, %arg5: memref<32x96xf32, #tpu.memory_space<vmem>>, %arg6: memref<1x96xf32, #tpu.memory_space<vmem>>, %arg7: memref<16x96xf32, #tpu.memory_space<vmem>>) attributes {dimension_semantics = [#tpu.dimension_semantics<parallel>, #tpu.dimension_semantics<parallel>], iteration_bounds = array<i64: 1, 1>, scalar_prefetch = 0 : i64, scratch_operands = 0 : i64, tpu.core_type = #tpu.core_type<tc>, window_params = [{transform_indices = @transform_0, window_bounds = array<i64: 16, 32>}, {pipeline_mode = #tpu.pipeline_mode<synchronous>, transform_indices = @transform_1, window_bounds = array<i64: 1, 32>}, {pipeline_mode = #tpu.pipeline_mode<synchronous>, transform_indices = @transform_2, window_bounds = array<i64: 1, 32>}, {transform_indices = @transform_3, window_bounds = array<i64: 32, 96>}, {transform_indices = @transform_4, window_bounds = array<i64: 1, 96>}, {transform_indices = @transform_5, window_bounds = array<i64: 16, 96>}]} {
    %c0 = arith.constant 0 : index
    %c0_0 = arith.constant 0 : index
    %0 = vector.load %arg2[%c0, %c0_0] : memref<16x32xf32, #tpu.memory_space<vmem>>, vector<16x32xf32>
    %cst = arith.constant dense<0.000000e+00> : vector<16xf32>
    %1 = vector.multi_reduction <add>, %0, %cst [1] : vector<16x32xf32> to vector<16xf32>
    %2 = vector.shape_cast %1 : vector<16xf32> to vector<16x1xf32>
    %cst_1 = arith.constant 3.200000e+01 : f32
    %3 = vector.broadcast %cst_1 : f32 to vector<16x1xf32>
    %4 = arith.divf %2, %3 : vector<16x1xf32>
    %5 = vector.broadcast %4 : vector<16x1xf32> to vector<16x32xf32>
    %6 = arith.subf %0, %5 : vector<16x32xf32>
    %7 = arith.mulf %6, %6 : vector<16x32xf32>
    %cst_2 = arith.constant dense<0.000000e+00> : vector<16xf32>
    %8 = vector.multi_reduction <add>, %7, %cst_2 [1] : vector<16x32xf32> to vector<16xf32>
    %9 = vector.shape_cast %8 : vector<16xf32> to vector<16x1xf32>
    %cst_3 = arith.constant 3.200000e+01 : f32
    %10 = vector.broadcast %cst_3 : f32 to vector<16x1xf32>
    %11 = arith.divf %9, %10 : vector<16x1xf32>
    %12 = vector.broadcast %4 : vector<16x1xf32> to vector<16x32xf32>
    %13 = arith.subf %0, %12 : vector<16x32xf32>
    %cst_4 = arith.constant 9.99999974E-6 : f32
    %14 = vector.broadcast %cst_4 : f32 to vector<16x1xf32>
    %15 = arith.addf %11, %14 : vector<16x1xf32>
    %16 = math.rsqrt %15 : vector<16x1xf32>
    %17 = vector.broadcast %16 : vector<16x1xf32> to vector<16x32xf32>
    %18 = arith.mulf %13, %17 : vector<16x32xf32>
    %c0_5 = arith.constant 0 : index
    %c0_6 = arith.constant 0 : index
    %19 = vector.load %arg3[%c0_5, %c0_6] : memref<1x32xf32, #tpu.memory_space<vmem>>, vector<1x32xf32>
    %20 = vector.broadcast %19 : vector<1x32xf32> to vector<16x32xf32>
    %21 = arith.mulf %18, %20 : vector<16x32xf32>
    %c0_7 = arith.constant 0 : index
    %c0_8 = arith.constant 0 : index
    %22 = vector.load %arg4[%c0_7, %c0_8] : memref<1x32xf32, #tpu.memory_space<vmem>>, vector<1x32xf32>
    %23 = vector.broadcast %22 : vector<1x32xf32> to vector<16x32xf32>
    %24 = arith.addf %21, %23 : vector<16x32xf32>
    %c0_9 = arith.constant 0 : index
    %c0_10 = arith.constant 0 : index
    %25 = vector.load %arg5[%c0_9, %c0_10] : memref<32x96xf32, #tpu.memory_space<vmem>>, vector<32x96xf32>
    %cst_11 = arith.constant dense<0.000000e+00> : vector<16x96xf32>
    %26 = tpu.matmul %24, %25, %cst_11 {dimension_numbers = #tpu.dot_dimension_numbers<[1], [0], [0], [1], [0, 0, 1, 1], [], []>} : vector<16x32xf32>, vector<32x96xf32>, vector<16x96xf32> -> vector<16x96xf32>
    %c0_12 = arith.constant 0 : index
    %c0_13 = arith.constant 0 : index
    %27 = vector.load %arg6[%c0_12, %c0_13] : memref<1x96xf32, #tpu.memory_space<vmem>>, vector<1x96xf32>
    %28 = vector.broadcast %27 : vector<1x96xf32> to vector<16x96xf32>
    %29 = arith.addf %26, %28 : vector<16x96xf32>
    %c0_14 = arith.constant 0 : index
    %c0_15 = arith.constant 0 : index
    %30 = vector.load %arg7[%c0_14, %c0_15] : memref<16x96xf32, #tpu.memory_space<vmem>>, vector<16x96xf32>
    tpu.vector_store %arg7[%c0_14, %c0_15], %29 {strides = array<i32>} : memref<16x96xf32, #tpu.memory_space<vmem>>, vector<16x96xf32>,
    return
  }
  func.func @transform_0(%arg0: i32, %arg1: i32) -> (i32, i32) {
    %c0_i32 = arith.constant 0 : i32
    %c0_i32_0 = arith.constant 0 : i32
    return %arg0, %c0_i32 : i32, i32
  }
  func.func @transform_1(%arg0: i32, %arg1: i32) -> (i32, i32) {
    %c0_i32 = arith.constant 0 : i32
    %c0_i32_0 = arith.constant 0 : i32
    %c0_i32_1 = arith.constant 0 : i32
    return %c0_i32, %c0_i32_0 : i32, i32
  }
  func.func @transform_2(%arg0: i32, %arg1: i32) -> (i32, i32) {
    %c0_i32 = arith.constant 0 : i32
    %c0_i32_0 = arith.constant 0 : i32
    %c0_i32_1 = arith.constant 0 : i32
    return %c0_i32, %c0_i32_0 : i32, i32
  }
  func.func @transform_3(%arg0: i32, %arg1: i32) -> (i32, i32) {
    %c0_i32 = arith.constant 0 : i32
    %c0_i32_0 = arith.constant 0 : i32
    return %c0_i32, %arg1 : i32, i32
  }
  func.func @transform_4(%arg0: i32, %arg1: i32) -> (i32, i32) {
    %c0_i32 = arith.constant 0 : i32
    %c0_i32_0 = arith.constant 0 : i32
    return %c0_i32, %arg1 : i32, i32
  }
  func.func @transform_5(%arg0: i32, %arg1: i32) -> (i32, i32) {
    %c0_i32 = arith.constant 0 : i32
    return %arg0, %arg1 : i32, i32
  }
}

</mosaic_0001>

<llo_original>
// kernel: tpu_custom_call.1
$region0: #{tpu_custom_call.1}
  #allocation0 [shape = 'u32[]', space=smem, size = 0x4, offset = 0x4, fixed_abs, tag = 'smem constant byte address 0x4 - core index']
  #allocation1 [shape = 'u32[72,128]{1,0:T(1,128)}', space=vmem, size = 0x9000, scoped, tag = 'internal scratch']
  %s0 = inlined_call_operand.hbm [shape: f32[16,32], index: 0, kind: input, shape index: {}]
  %s1 = inlined_call_operand.hbm [shape: f32[1,32], index: 1, kind: input, shape index: {}]
  %s2 = inlined_call_operand.vmem [shape: f32[1,32], index: 2, kind: input, shape index: {}]
  %s3 = inlined_call_operand.hbm [shape: f32[32,96], index: 3, kind: input, shape index: {}]
  %s4 = inlined_call_operand.vmem [shape: f32[1,96], index: 4, kind: input, shape index: {}]
  %s5 = inlined_call_operand.hbm [shape: f32[16,96], index: 5, kind: output, shape index: {}]
  %s6 = sld [smem:[#allocation0]]
  $region42: #{tpu_custom_call.1} parent=0
    _
  %s8 = ssub.s32 1, %s6
  %s9 = scalar_select 0, %s8, %s6
  $region1: #{tpu_custom_call.1} parent=0
    #allocation2 [shape = 'u8[8192]{0}', space=vmem, size = 0x2000, scoped, tag = 'input window, operand 0, single buffered']
    #allocation3 [shape = 's32[1]{0}', space=sflag, size = 0x4, scoped, tag = 'scoped memory for tpu_custom_call.1']
    #allocation4 [shape = 's32[1]{0}', space=sflag, size = 0x4, scoped, tag = 'scoped memory for tpu_custom_call.1']
    #allocation5 [shape = 'u8[512]{0}', space=vmem, size = 0x400, scoped, tag = 'input window, operand 1, single buffered']
    #allocation6 [shape = 's32[1]{0}', space=sflag, size = 0x4, scoped, tag = 'scoped memory for tpu_custom_call.1']
    #allocation7 [shape = 'u8[16384]{0}', space=vmem, size = 0x4000, scoped, tag = 'input window, operand 3, single buffered']
    #allocation8 [shape = 'u8[8192]{0}', space=vmem, size = 0x2000, scoped, tag = 'output window, operand 0, single buffered']
    %10 = vsyncpa [#allocation3], 0
    %11 = vsyncpa [#allocation6], 0
    %12 = vsyncpa [#allocation4], 0
    // Predicated region
    $region2: #{tpu_custom_call.1} parent=1 // pred_check
      _
    $region3: #{tpu_custom_call.1} parent=1 // pred_check_branch
      %14 = sbr.rel (0) target = $region5
    $region4: #{tpu_custom_call.1} parent=1 // pred_region
      %16 = vsyncadd [#allocation3], 0
      %s17 = sshll.u32 %s0, 4
      %s18 = int_to_ptr.hbm [resolvable:$true] %s17
      %s19 = sshll.u32 [#allocation2], 4
      %s20 = int_to_ptr.vmem [resolvable:$true] %s19
      %25 = dma.hbm_to_vmem [thread:$0]  %s18, 256, %s20, [#allocation3], 128, 128, 8
    $region5: #{tpu_custom_call.1} parent=1 // pred_fallthru
      _
    // Predicated region
    $region6: #{tpu_custom_call.1} parent=1 // pred_check
      _
    $region7: #{tpu_custom_call.1} parent=1 // pred_check_branch
      %27 = sbr.rel (0) target = $region9
    $region8: #{tpu_custom_call.1} parent=1 // pred_region
      %29 = vsyncadd [#allocation6], 0
      %s31 = sshll.u32 %s1, 4
      %s32 = int_to_ptr.hbm [resolvable:$true] %s31
      %s33 = sshll.u32 [#allocation5], 4
      %s34 = int_to_ptr.vmem [resolvable:$true] %s33
      %36 = dma.hbm_to_vmem [thread:$0]  %s32, 16, %s34, [#allocation6]
    $region9: #{tpu_custom_call.1} parent=1 // pred_fallthru
      _
    // Predicated region
    $region10: #{tpu_custom_call.1} parent=1 // pred_check
      _
    $region11: #{tpu_custom_call.1} parent=1 // pred_check_branch
      %38 = sbr.rel (0) target = $region13
    $region12: #{tpu_custom_call.1} parent=1 // pred_region
      _
    $region13: #{tpu_custom_call.1} parent=1 // pred_fallthru
      _
    // Predicated region
    $region14: #{tpu_custom_call.1} parent=1 // pred_check
      _
    $region15: #{tpu_custom_call.1} parent=1 // pred_check_branch
      %40 = sbr.rel (0) target = $region17
    $region16: #{tpu_custom_call.1} parent=1 // pred_region
      %42 = vsyncadd [#allocation6], 0
      %s43 = sshll.u32 %s3, 4
      %s44 = int_to_ptr.hbm [resolvable:$true] %s43
      %s45 = sshll.u32 [#allocation7], 4
      %s46 = int_to_ptr.vmem [resolvable:$true] %s45
      %51 = dma.hbm_to_vmem [thread:$0]  %s44, 512, %s46, [#allocation6], 128, 128, 8
    $region17: #{tpu_custom_call.1} parent=1 // pred_fallthru
      _
    // Predicated region
    $region18: #{tpu_custom_call.1} parent=1 // pred_check
      _
    $region19: #{tpu_custom_call.1} parent=1 // pred_check_branch
      %53 = sbr.rel (0) target = $region21
    $region20: #{tpu_custom_call.1} parent=1 // pred_region
      _
    $region21: #{tpu_custom_call.1} parent=1 // pred_fallthru
      _
    // Predicated region
    $region22: #{tpu_custom_call.1} parent=1 // pred_check
      _
    $region23: #{tpu_custom_call.1} parent=1 // pred_check_branch
      %55 = sbr.rel (0) target = $region25
    $region24: #{tpu_custom_call.1} parent=1 // pred_region
      %57 = dma.done [#allocation3], 256
    $region25: #{tpu_custom_call.1} parent=1 // pred_fallthru
      _
    // Predicated region
    $region26: #{tpu_custom_call.1} parent=1 // pred_check
      _
    $region27: #{tpu_custom_call.1} parent=1 // pred_check_branch
      %59 = sbr.rel (0) target = $region29
    $region28: #{tpu_custom_call.1} parent=1 // pred_region
      %61 = dma.done [#allocation6], 16
    $region29: #{tpu_custom_call.1} parent=1 // pred_fallthru
      _
    // Predicated region
    $region30: #{tpu_custom_call.1} parent=1 // pred_check
      _
    $region31: #{tpu_custom_call.1} parent=1 // pred_check_branch
      %63 = sbr.rel (0) target = $region33
    $region32: #{tpu_custom_call.1} parent=1 // pred_region
      %65 = dma.done [#allocation6], 512
    $region33: #{tpu_custom_call.1} parent=1 // pred_fallthru
      _
    %v66 = vld [vmem:[#allocation2] sm:$0xff]
    %v67 = vld [vmem:[#allocation2 + $0x8] sm:$0xff]
    %vm68 = vcmask 261120
    %v69 = vsel %vm68, %v66, 0.0
    %70 = vadd.xlane.f32.xlu0 %v69
    %v71 = vpop.xlane.xlu0 %70
    %v72 = vsel %vm68, %v67, 0.0
    %73 = vadd.xlane.f32.xlu0 %v72
    %v74 = vpop.xlane.xlu0 %73
    %v75 = vrcp.pop 32.0
    %v76 = vmul.f32 32.0, %v75
    %v77 = vsub.f32 1.0, %v76
    %v78 = vmul.f32 %v75, %v77
    %v79 = vadd.f32 %v75, %v78
    %vm80 = vweird.f32 %v75
    %v81 = vsel %vm80, %v75, %v79
    %v82 = vmul.f32 %v71, %v81
    %v83 = vmul.f32 %v74, %v81
    %v84 = vsub.f32 %v66, %v82
    %v85 = vsub.f32 %v67, %v83
    %v86 = vmul.f32 %v84, %v84
    %v87 = vmul.f32 %v85, %v85
    %v88 = vsel %vm68, %v86, 0.0
    %89 = vadd.xlane.f32.xlu0 %v88
    %v90 = vpop.xlane.xlu0 %89
    %v91 = vsel %vm68, %v87, 0.0
    %92 = vadd.xlane.f32.xlu0 %v91
    %v93 = vpop.xlane.xlu0 %92
    %v94 = vmul.f32 %v90, %v81
    %v95 = vmul.f32 %v93, %v81
    %v96 = vadd.f32 %v94, 1e-05
    %v97 = vadd.f32 %v95, 1e-05
    %v98 = vrsqrt.pop %v96
    %v99 = vmul.f32 %v98, %v96
    %v100 = vmul.f32 %v99, %v98
    %v101 = vmul.f32 0.5, %v100
    %v102 = vsub.f32 1.5, %v101
    %v103 = vmul.f32 %v98, %v102
    %vm104 = vweird.f32 %v96
    %vm105 = vweird.f32 %v98
    %vm106 = vmor %vm104, %vm105
    %v107 = vsel %vm106, %v98, %v103
    %v108 = vrsqrt.pop %v97
    %v109 = vmul.f32 %v108, %v97
    %v110 = vmul.f32 %v109, %v108
    %v111 = vmul.f32 0.5, %v110
    %v112 = vsub.f32 1.5, %v111
    %v113 = vmul.f32 %v108, %v112
    %vm114 = vweird.f32 %v97
    %vm115 = vweird.f32 %v108
    %vm116 = vmor %vm114, %vm115
    %v117 = vsel %vm116, %v108, %v113
    %v118 = vmul.f32 %v84, %v107
    %v119 = vmul.f32 %v85, %v117
    %v120 = vld [vmem:[#allocation5] sm:$0x1]
    %v122 = vperm.slane %v120, 0
    %v124 = vmul.f32 %v118, %v122
    %v125 = vmul.f32 %v119, %v122
    %v126 = vld [vmem:[%s2] sm:$0x1]
    %v128 = vperm.slane %v126, 0
    %v130 = vadd.f32 %v124, %v128
    %v131 = vadd.f32 %v125, %v128
    %v132 = vld [vmem:[#allocation7] sm:$0xff]
    %v133 = vld [vmem:[#allocation7 + $0x8] sm:$0xff]
    %v134 = vld [vmem:[#allocation7 + $0x10] sm:$0xff]
    %v135 = vld [vmem:[#allocation7 + $0x18] sm:$0xff]
    %v136 = vld [vmem:[%s4] sm:$0x1]
    %v138 = vperm.slane %v136, 0
    %v141 = vsel %vm68, %v130, 0
    %v144 = vsel %vm68, %v131, 0
    %146 = vmatpush.msra.mxu0 0.0
    %147 = vmatpush.msra.mxu0 0.0
    %148 = vmatpush.msra.mxu0 0.0
    %149 = vmatpush.msra.mxu0 0.0
    %150 = vmatpush.msra.mxu0 0.0
    %151 = vmatpush.msra.mxu0 0.0
    %152 = vmatpush.msra.mxu0 0.0
    %153 = vmatpush.msra.mxu0 0.0
    %154 = vmatpush.msra.mxu0 0.0
    %155 = vmatpush.msra.mxu0 0.0
    %156 = vmatpush.msra.mxu0 0.0
    %157 = vmatpush.msra.mxu0 0.0
    %158 = vmatpush.msra.mxu0 %v135
    %159 = vmatpush.msra.mxu0 %v134
    %160 = vmatpush.msra.mxu0 %v133
    %161 = vmatpush.msra.mxu0 %v132
    %162 = vmatmul.f32.gmra.mxu0 %v141
    %v163 = vpop.f32.mrf.mxu0
    %v164 = vadd.f32 %v138, %v163
    %165 = vmatmul.f32.gmra.mxu0 %v144
    %v166 = vpop.f32.mrf.mxu0
    %v167 = vadd.f32 %v138, %v166
    %168 = vdwg.mxu0
    %vm169 = vcmask 785408
    %170 = vst.msk [vmem:[#allocation8] sm:$0xff] %vm169, %v164
    %171 = vst.msk [vmem:[#allocation8 + $0x8] sm:$0xff] %vm169, %v167
    // Predicated region
    $region34: #{tpu_custom_call.1} parent=1 // pred_check
      _
    $region35: #{tpu_custom_call.1} parent=1 // pred_check_branch
      %173 = sbr.rel (0) target = $region37
    $region36: #{tpu_custom_call.1} parent=1 // pred_region
      %175 = vsyncadd [#allocation4], 0
      %s176 = sshll.u32 [#allocation8], 4
      %s177 = int_to_ptr.vmem [resolvable:$true] %s176
      %s178 = sshll.u32 %s5, 4
      %s179 = int_to_ptr.hbm [resolvable:$true] %s178
      %184 = dma.vmem_to_hbm [thread:$0]  %s177, 256, %s179, [#allocation4], 128, 128, 8
    $region37: #{tpu_custom_call.1} parent=1 // pred_fallthru
      _
    // Predicated region
    $region38: #{tpu_custom_call.1} parent=1 // pred_check
      _
    $region39: #{tpu_custom_call.1} parent=1 // pred_check_branch
      %186 = sbr.rel (0) target = $region41
    $region40: #{tpu_custom_call.1} parent=1 // pred_region
      %188 = dma.done [#allocation4], 256
    $region41: #{tpu_custom_call.1} parent=1 // pred_fallthru
      _
    %189 = vsyncpa [#allocation3], 1
    %190 = vsyncpa [#allocation6], 1
    %191 = vsyncpa [#allocation4], 1

</llo_original>
